<compile_context>
chip_gen: v5e
topology: v5e:2x2
jax: 0.10.0
libtpu: 0.0.40
codegen_flags: <defaults>
</compile_context>

<pallas_src>
import math
import jax
import jax.numpy as jnp
from jax.experimental import pallas as pl
from jax.experimental.pallas import tpu as pltpu


# ----------------------------------------------------------------------------
# Kernel
# ----------------------------------------------------------------------------
def ffnn_kernel(x_ref, w1_ref, b1_ref, w2_ref, b2_ref, o_ref):
    # First linear layer: bf16 operands on the MXU, f32 accumulation.
    h = jnp.dot(x_ref[...], w1_ref[...], preferred_element_type=jnp.float32)
    # Bias add (VPU) + tanh (EUP) in f32 — portable to v5e (no bf16 VPU/EUP).
    h = jnp.tanh(h + b1_ref[...])
    # Second linear layer: downcast activations to bf16 MXU operands, f32 acc.
    y = jnp.dot(h.astype(w2_ref.dtype), w2_ref[...],
                preferred_element_type=jnp.float32)
    # Emit in final dtype inside the kernel (no external cast pass).
    o_ref[...] = (y + b2_ref[...]).astype(o_ref.dtype)


# ----------------------------------------------------------------------------
# Parameter preparation (run ONCE, outside the per-call path)
# ----------------------------------------------------------------------------
def _round_up(x, m):
    return pl.cdiv(x, m) * m


def prepare_ffnn_params(w1, b1, w2, b2):
    """Pad feature dims to multiples of 128 and cast matmul operands to bf16.

    Returns a dict of padded params + original logical dims. Zero padding is
    mathematically transparent (padded K columns contribute 0; padded hidden
    units have bias 0 -> tanh(0) = 0 -> 0 contribution; padded output columns
    are sliced off).
    """
    in_dim, hidden = w1.shape
    out_dim = w2.shape[-1]
    in_p = _round_up(in_dim, 128)
    hid_p = _round_up(hidden, 128)
    out_p = _round_up(out_dim, 128)

    w1_p = jnp.zeros((in_p, hid_p), jnp.bfloat16).at[:in_dim, :hidden].set(
        w1.astype(jnp.bfloat16))
    b1_p = jnp.zeros((1, hid_p), jnp.float32).at[:, :hidden].set(
        b1.reshape(1, -1).astype(jnp.float32))
    w2_p = jnp.zeros((hid_p, out_p), jnp.bfloat16).at[:hidden, :out_dim].set(
        w2.astype(jnp.bfloat16))
    b2_p = jnp.zeros((1, out_p), jnp.float32).at[:, :out_dim].set(
        b2.reshape(1, -1).astype(jnp.float32))

    return dict(w1=w1_p, b1=b1_p, w2=w2_p, b2=b2_p,
                in_dim=in_dim, hidden=hidden, out_dim=out_dim)


# ----------------------------------------------------------------------------
# Forward wrapper
# ----------------------------------------------------------------------------
def two_layer_ffnn(x, params, *, tm=256):
    """x: (B, in_dim) -> (B, out_dim) in x.dtype. `params` from
    prepare_ffnn_params (already padded / bf16)."""
    B, in_dim = x.shape
    assert in_dim == params["in_dim"]
    out_dim = params["out_dim"]
    w1_p, b1_p, w2_p, b2_p = (params["w1"], params["b1"],
                              params["w2"], params["b2"])
    in_p, hid_p = w1_p.shape
    out_p = w2_p.shape[1]
    out_dtype = x.dtype

    # Batch tile: multiple of 16 (bf16 packs 16 rows per sublane tile).
    # Default 256 is a good single-TC (v5e/v6e) choice; pass tm=128 for
    # better megacore balance on v7x when B is moderate.
    TM = min(tm, int(_round_up(B, 16)))
    TM = int(_round_up(TM, 16))
    B_p = int(_round_up(B, TM))

    # Only materialize a padded copy of x when padding is actually needed.
    if B_p == B and in_p == in_dim:
        x_p = x.astype(jnp.bfloat16)          # no-op if already bf16
    else:
        x_p = jnp.zeros((B_p, in_p), jnp.bfloat16).at[:B, :in_dim].set(
            x.astype(jnp.bfloat16))

    grid = (B_p // TM,)

    out_bytes = jnp.dtype(out_dtype).itemsize
    # VMEM working set: single-buffered weights/biases + double-buffered
    # x / out tiles + f32 intermediates; 2x headroom, floor 8 MiB.
    weight_bytes = (w1_p.size + w2_p.size) * 2 + (b1_p.size + b2_p.size) * 4
    tile_bytes = 2 * (TM * in_p * 2) + 2 * (TM * out_p * out_bytes)
    interm_bytes = TM * (hid_p + out_p) * 4
    vmem_limit = int(min(max(2 * (weight_bytes + tile_bytes + interm_bytes)
                             + (4 << 20), 8 << 20), 64 << 20))

    cost = pl.CostEstimate(
        flops=2 * B_p * (in_p * hid_p + hid_p * out_p),
        transcendentals=B_p * hid_p,
        bytes_accessed=(x_p.size * 2 + weight_bytes + B_p * out_p * out_bytes),
    )

    out_padded = pl.pallas_call(
        ffnn_kernel,
        out_shape=jax.ShapeDtypeStruct((B_p, out_p), out_dtype),
        grid_spec=pltpu.PrefetchScalarGridSpec(
            num_scalar_prefetch=0,
            grid=grid,
            in_specs=[
                # x tile: pipelined (default double-buffered).
                pl.BlockSpec((TM, in_p), lambda i: (i, 0)),
                # Weights / biases: VMEM-resident, constant block index ->
                # single-buffered (halves their VMEM footprint).
                pl.BlockSpec((in_p, hid_p), lambda i: (0, 0),
                             pipeline_mode=pl.Buffered(1)),
                pl.BlockSpec((1, hid_p), lambda i: (0, 0),
                             pipeline_mode=pl.Buffered(1)),
                pl.BlockSpec((hid_p, out_p), lambda i: (0, 0),
                             pipeline_mode=pl.Buffered(1)),
                pl.BlockSpec((1, out_p), lambda i: (0, 0),
                             pipeline_mode=pl.Buffered(1)),
            ],
            out_specs=pl.BlockSpec((TM, out_p), lambda i: (i, 0)),
        ),
        compiler_params=pltpu.CompilerParams(
            dimension_semantics=("parallel",),   # megacore split on v7x
            vmem_limit_bytes=vmem_limit,
        ),
        cost_estimate=cost,
    )(x_p, w1_p, b1_p, w2_p, b2_p)

    return out_padded[:B, :out_dim]


# ----------------------------------------------------------------------------
# PyTorch-equivalent init + self-test
# ----------------------------------------------------------------------------
def init_linear_params(key, in_dim, out_dim, dtype=jnp.float32):
    """PyTorch nn.Linear default init: W, b ~ U(-1/sqrt(in), 1/sqrt(in)).
       Returned W is (in_dim, out_dim) (transposed vs. torch storage)."""
    kw, kb = jax.random.split(key)
    bound = 1.0 / math.sqrt(in_dim)
    w = jax.random.uniform(kw, (in_dim, out_dim), dtype, minval=-bound, maxval=bound)
    b = jax.random.uniform(kb, (1, out_dim), dtype, minval=-bound, maxval=bound)
    return w, b


if __name__ == "__main__":
    # Small shapes; non-multiples of 128 exercise the padding paths.
    batch, input_dim, hidden_dim, out_dim = 32, 48, 96, 10

    key = jax.random.PRNGKey(0)
    kx, k1, k2 = jax.random.split(key, 3)

    x = jax.random.normal(kx, (batch, input_dim), jnp.float32)
    w1, b1 = init_linear_params(k1, input_dim, hidden_dim)
    w2, b2 = init_linear_params(k2, hidden_dim, out_dim)

    # Weight prep happens ONCE, outside the per-call path.
    params = prepare_ffnn_params(w1, b1, w2, b2)

    fwd = jax.jit(lambda xx: two_layer_ffnn(xx, params))
    out = jax.block_until_ready(fwd(x))
    assert out.shape == (batch, out_dim)
    assert out.dtype == x.dtype

    # Reference with matching mixed precision (bf16 MXU operands, f32 acc).
    h_ref = jnp.dot(x.astype(jnp.bfloat16), w1.astype(jnp.bfloat16),
                    preferred_element_type=jnp.float32) + b1
    h_ref = jnp.tanh(h_ref)
    ref = jnp.dot(h_ref.astype(jnp.bfloat16), w2.astype(jnp.bfloat16),
                  preferred_element_type=jnp.float32) + b2
    assert jnp.allclose(out, ref, atol=1e-3, rtol=1e-3)

    # Loose check against the full-f32 math (semantic sanity for bf16 path).
    ref_f32 = jnp.tanh(x @ w1 + b1) @ w2 + b2
    assert jnp.allclose(out, ref_f32, atol=5e-2, rtol=5e-2)

    print("KERNEL_OK")
</pallas_src>

<mosaic_0001>
module attributes {stable_mosaic.version = 11 : i64} {
  func.func @ffnn_kernel(%arg0: i32, %arg1: memref<32x128xbf16, #tpu.memory_space<vmem>>, %arg2: memref<128x128xbf16, #tpu.memory_space<vmem>>, %arg3: memref<1x128xf32, #tpu.memory_space<vmem>>, %arg4: memref<128x128xbf16, #tpu.memory_space<vmem>>, %arg5: memref<1x128xf32, #tpu.memory_space<vmem>>, %arg6: memref<32x128xf32, #tpu.memory_space<vmem>>) attributes {dimension_semantics = [#tpu.dimension_semantics<parallel>], iteration_bounds = array<i64: 1>, scalar_prefetch = 0 : i64, scratch_operands = 0 : i64, tpu.core_type = #tpu.core_type<tc>, window_params = [{transform_indices = @transform_0, window_bounds = array<i64: 32, 128>}, {pipeline_mode = #tpu.pipeline_mode<synchronous>, transform_indices = @transform_1, window_bounds = array<i64: 128, 128>}, {pipeline_mode = #tpu.pipeline_mode<synchronous>, transform_indices = @transform_2, window_bounds = array<i64: 1, 128>}, {pipeline_mode = #tpu.pipeline_mode<synchronous>, transform_indices = @transform_3, window_bounds = array<i64: 128, 128>}, {pipeline_mode = #tpu.pipeline_mode<synchronous>, transform_indices = @transform_4, window_bounds = array<i64: 1, 128>}, {transform_indices = @transform_5, window_bounds = array<i64: 32, 128>}]} {
    %c0 = arith.constant 0 : index
    %c0_0 = arith.constant 0 : index
    %0 = vector.load %arg1[%c0, %c0_0] : memref<32x128xbf16, #tpu.memory_space<vmem>>, vector<32x128xbf16>
    %c0_1 = arith.constant 0 : index
    %c0_2 = arith.constant 0 : index
    %1 = vector.load %arg2[%c0_1, %c0_2] : memref<128x128xbf16, #tpu.memory_space<vmem>>, vector<128x128xbf16>
    %cst = arith.constant dense<0.000000e+00> : vector<32x128xf32>
    %2 = tpu.matmul %0, %1, %cst {dimension_numbers = #tpu.dot_dimension_numbers<[1], [0], [0], [1], [0, 0, 1, 1], [], []>} : vector<32x128xbf16>, vector<128x128xbf16>, vector<32x128xf32> -> vector<32x128xf32>
    %c0_3 = arith.constant 0 : index
    %c0_4 = arith.constant 0 : index
    %3 = vector.load %arg3[%c0_3, %c0_4] : memref<1x128xf32, #tpu.memory_space<vmem>>, vector<1x128xf32>
    %4 = vector.broadcast %3 : vector<1x128xf32> to vector<32x128xf32>
    %5 = arith.addf %2, %4 : vector<32x128xf32>
    %6 = math.tanh %5 : vector<32x128xf32>
    %7 = arith.truncf %6 : vector<32x128xf32> to vector<32x128xbf16>
    %c0_5 = arith.constant 0 : index
    %c0_6 = arith.constant 0 : index
    %8 = vector.load %arg4[%c0_5, %c0_6] : memref<128x128xbf16, #tpu.memory_space<vmem>>, vector<128x128xbf16>
    %cst_7 = arith.constant dense<0.000000e+00> : vector<32x128xf32>
    %9 = tpu.matmul %7, %8, %cst_7 {dimension_numbers = #tpu.dot_dimension_numbers<[1], [0], [0], [1], [0, 0, 1, 1], [], []>} : vector<32x128xbf16>, vector<128x128xbf16>, vector<32x128xf32> -> vector<32x128xf32>
    %c0_8 = arith.constant 0 : index
    %c0_9 = arith.constant 0 : index
    %10 = vector.load %arg5[%c0_8, %c0_9] : memref<1x128xf32, #tpu.memory_space<vmem>>, vector<1x128xf32>
    %11 = vector.broadcast %10 : vector<1x128xf32> to vector<32x128xf32>
    %12 = arith.addf %9, %11 : vector<32x128xf32>
    %c0_10 = arith.constant 0 : index
    %c0_11 = arith.constant 0 : index
    %13 = vector.load %arg6[%c0_10, %c0_11] : memref<32x128xf32, #tpu.memory_space<vmem>>, vector<32x128xf32>
    tpu.vector_store %arg6[%c0_10, %c0_11], %12 {strides = array<i32>} : memref<32x128xf32, #tpu.memory_space<vmem>>, vector<32x128xf32>,
    return
  }
  func.func @transform_0(%arg0: i32) -> (i32, i32) {
    %c0_i32 = arith.constant 0 : i32
    %c0_i32_0 = arith.constant 0 : i32
    return %arg0, %c0_i32 : i32, i32
  }
  func.func @transform_1(%arg0: i32) -> (i32, i32) {
    %c0_i32 = arith.constant 0 : i32
    %c0_i32_0 = arith.constant 0 : i32
    %c0_i32_1 = arith.constant 0 : i32
    return %c0_i32, %c0_i32_0 : i32, i32
  }
  func.func @transform_2(%arg0: i32) -> (i32, i32) {
    %c0_i32 = arith.constant 0 : i32
    %c0_i32_0 = arith.constant 0 : i32
    %c0_i32_1 = arith.constant 0 : i32
    return %c0_i32, %c0_i32_0 : i32, i32
  }
  func.func @transform_3(%arg0: i32) -> (i32, i32) {
    %c0_i32 = arith.constant 0 : i32
    %c0_i32_0 = arith.constant 0 : i32
    %c0_i32_1 = arith.constant 0 : i32
    return %c0_i32, %c0_i32_0 : i32, i32
  }
  func.func @transform_4(%arg0: i32) -> (i32, i32) {
    %c0_i32 = arith.constant 0 : i32
    %c0_i32_0 = arith.constant 0 : i32
    %c0_i32_1 = arith.constant 0 : i32
    return %c0_i32, %c0_i32_0 : i32, i32
  }
  func.func @transform_5(%arg0: i32) -> (i32, i32) {
    %c0_i32 = arith.constant 0 : i32
    %c0_i32_0 = arith.constant 0 : i32
    return %arg0, %c0_i32 : i32, i32
  }
}

</mosaic_0001>

<llo_original>
// kernel: _lambda_.1
$region0: #{_lambda_.1}
  #allocation0 [shape = 'u32[]', space=smem, size = 0x4, offset = 0x4, fixed_abs, tag = 'smem constant byte address 0x4 - core index']
  #allocation1 [shape = 'u32[72,128]{1,0:T(1,128)}', space=vmem, size = 0x9000, scoped, tag = 'internal scratch']
  %s0 = inlined_call_operand.vmem [shape: bf16[32,128], index: 0, kind: input, shape index: {}]
  %s1 = inlined_call_operand.hbm [shape: bf16[128,128], index: 1, kind: input, shape index: {}]
  %s2 = inlined_call_operand.vmem [shape: f32[1,128], index: 2, kind: input, shape index: {}]
  %s3 = inlined_call_operand.vmem [shape: bf16[128,128], index: 3, kind: input, shape index: {}]
  %s4 = inlined_call_operand.vmem [shape: f32[1,128], index: 4, kind: input, shape index: {}]
  %s5 = inlined_call_operand.vmem [shape: f32[32,128], index: 5, kind: output, shape index: {}]
  %s6 = sld [smem:[#allocation0]]
  $region34: #{_lambda_.1} parent=0
    _
  %s8 = ssub.s32 1, %s6
  %s9 = scalar_select 0, %s8, %s6
  $region1: #{_lambda_.1} parent=0
    #allocation2 [shape = 'u8[32768]{0}', space=vmem, size = 0x8000, scoped, tag = 'input window, operand 1, single buffered']
    #allocation3 [shape = 's32[1]{0}', space=sflag, size = 0x4, scoped, tag = 'scoped memory for _lambda_.1']
    %10 = vsyncpa [#allocation3], 0
    // Predicated region
    $region2: #{_lambda_.1} parent=1 // pred_check
      _
    $region3: #{_lambda_.1} parent=1 // pred_check_branch
      %12 = sbr.rel (0) target = $region5
    $region4: #{_lambda_.1} parent=1 // pred_region
      _
    $region5: #{_lambda_.1} parent=1 // pred_fallthru
      _
    // Predicated region
    $region6: #{_lambda_.1} parent=1 // pred_check
      _
    $region7: #{_lambda_.1} parent=1 // pred_check_branch
      %14 = sbr.rel (0) target = $region9
    $region8: #{_lambda_.1} parent=1 // pred_region
      %16 = vsyncadd [#allocation3], 0
      %s17 = sshll.u32 %s1, 4
      %s18 = int_to_ptr.hbm [resolvable:$true] %s17
      %s19 = sshll.u32 [#allocation2], 4
      %s20 = int_to_ptr.vmem [resolvable:$true] %s19
      %25 = dma.hbm_to_vmem [thread:$0]  %s18, 1024, %s20, [#allocation3], 64, 64, 4
    $region9: #{_lambda_.1} parent=1 // pred_fallthru
      _
    // Predicated region
    $region10: #{_lambda_.1} parent=1 // pred_check
      _
    $region11: #{_lambda_.1} parent=1 // pred_check_branch
      %27 = sbr.rel (0) target = $region13
    $region12: #{_lambda_.1} parent=1 // pred_region
      _
    $region13: #{_lambda_.1} parent=1 // pred_fallthru
      _
    // Predicated region
    $region14: #{_lambda_.1} parent=1 // pred_check
      _
    $region15: #{_lambda_.1} parent=1 // pred_check_branch
      %29 = sbr.rel (0) target = $region17
    $region16: #{_lambda_.1} parent=1 // pred_region
      _
    $region17: #{_lambda_.1} parent=1 // pred_fallthru
      _
    // Predicated region
    $region18: #{_lambda_.1} parent=1 // pred_check
      _
    $region19: #{_lambda_.1} parent=1 // pred_check_branch
      %31 = sbr.rel (0) target = $region21
    $region20: #{_lambda_.1} parent=1 // pred_region
      _
    $region21: #{_lambda_.1} parent=1 // pred_fallthru
      _
    // Predicated region
    $region22: #{_lambda_.1} parent=1 // pred_check
      _
    $region23: #{_lambda_.1} parent=1 // pred_check_branch
      %33 = sbr.rel (0) target = $region25
    $region24: #{_lambda_.1} parent=1 // pred_region
      %35 = dma.done [#allocation3], 1024
    $region25: #{_lambda_.1} parent=1 // pred_fallthru
      _
    %v36 = vld [vmem:[%s0] sm:$0xf]
    %v37 = vld [vmem:[%s0 + $0x4] sm:$0xf]
    %v38 = vld [vmem:[%s0 + $0x8] sm:$0xf]
    %v39 = vld [vmem:[%s0 + $0xc] sm:$0xf]
    %v40 = vld [vmem:[#allocation2] sm:$0xf]
    %v41 = vld [vmem:[#allocation2 + $0x4] sm:$0xf]
    %v42 = vld [vmem:[#allocation2 + $0x8] sm:$0xf]
    %v43 = vld [vmem:[#allocation2 + $0xc] sm:$0xf]
    %v44 = vld [vmem:[#allocation2 + $0x10] sm:$0xf]
    %v45 = vld [vmem:[#allocation2 + $0x14] sm:$0xf]
    %v46 = vld [vmem:[#allocation2 + $0x18] sm:$0xf]
    %v47 = vld [vmem:[#allocation2 + $0x1c] sm:$0xf]
    %v48 = vld [vmem:[#allocation2 + $0x20] sm:$0xf]
    %v49 = vld [vmem:[#allocation2 + $0x24] sm:$0xf]
    %v50 = vld [vmem:[#allocation2 + $0x28] sm:$0xf]
    %v51 = vld [vmem:[#allocation2 + $0x2c] sm:$0xf]
    %v52 = vld [vmem:[#allocation2 + $0x30] sm:$0xf]
    %v53 = vld [vmem:[#allocation2 + $0x34] sm:$0xf]
    %v54 = vld [vmem:[#allocation2 + $0x38] sm:$0xf]
    %v55 = vld [vmem:[#allocation2 + $0x3c] sm:$0xf]
    %v56 = vld [vmem:[%s2] sm:$0x1]
    %v58 = vperm.slane %v56, 0
    %v64 = vunpack.c.l.b16 %v36
    %v65 = vunpack.c.l.b16 %v37
    %v66 = vunpack.c.l.b16 %v38
    %v67 = vunpack.c.l.b16 %v39
    %v68 = vpack.c.b16 %v65, %v64
    %v69 = vpack.c.b16 %v67, %v66
    %v88 = vunpack.c.l.b16 %v40
    %v89 = vunpack.c.l.b16 %v41
    %v90 = vunpack.c.l.b16 %v42
    %v91 = vunpack.c.l.b16 %v43
    %v92 = vunpack.c.l.b16 %v44
    %v93 = vunpack.c.l.b16 %v45
    %v94 = vunpack.c.l.b16 %v46
    %v95 = vunpack.c.l.b16 %v47
    %v96 = vunpack.c.l.b16 %v48
    %v97 = vunpack.c.l.b16 %v49
    %v98 = vunpack.c.l.b16 %v50
    %v99 = vunpack.c.l.b16 %v51
    %v100 = vunpack.c.l.b16 %v52
    %v101 = vunpack.c.l.b16 %v53
    %v102 = vunpack.c.l.b16 %v54
    %v103 = vunpack.c.l.b16 %v55
    %v104 = vpack.c.b16 %v89, %v88
    %v105 = vpack.c.b16 %v91, %v90
    %v106 = vpack.c.b16 %v93, %v92
    %v107 = vpack.c.b16 %v95, %v94
    %v108 = vpack.c.b16 %v97, %v96
    %v109 = vpack.c.b16 %v99, %v98
    %v110 = vpack.c.b16 %v101, %v100
    %v111 = vpack.c.b16 %v103, %v102
    %120 = vmatpush.bf16.msra.mxu0 %v111
    %121 = vmatpush.bf16.msra.mxu0 %v110
    %122 = vmatpush.bf16.msra.mxu0 %v109
    %123 = vmatpush.bf16.msra.mxu0 %v108
    %124 = vmatpush.bf16.msra.mxu0 %v107
    %125 = vmatpush.bf16.msra.mxu0 %v106
    %126 = vmatpush.bf16.msra.mxu0 %v105
    %127 = vmatpush.bf16.msra.mxu0 %v104
    %128 = vmatmul.bf16.gmra.mxu0 %v68
    %v129 = vpop.f32.mrf.mxu0
    %v130 = vadd.f32 %v58, %v129
    %v131 = vpop.f32.mrf.mxu0
    %v132 = vadd.f32 %v58, %v131
    %133 = vmatmul.bf16.gmra.mxu0 %v69
    %v134 = vpop.f32.mrf.mxu0
    %v135 = vadd.f32 %v58, %v134
    %v136 = vpop.f32.mrf.mxu0
    %v137 = vadd.f32 %v58, %v136
    %138 = vdwg.mxu0
    %v139 = vtanh.pop %v130
    %v140 = vtanh.pop %v132
    %v141 = vtanh.pop %v135
    %v142 = vtanh.pop %v137
    %v143 = vpack.c.bf16 %v140, %v139
    %v144 = vpack.c.bf16 %v142, %v141
    %v145 = vld [vmem:[%s3] sm:$0xf]
    %v146 = vld [vmem:[%s3 + $0x4] sm:$0xf]
    %v147 = vld [vmem:[%s3 + $0x8] sm:$0xf]
    %v148 = vld [vmem:[%s3 + $0xc] sm:$0xf]
    %v149 = vld [vmem:[%s3 + $0x10] sm:$0xf]
    %v150 = vld [vmem:[%s3 + $0x14] sm:$0xf]
    %v151 = vld [vmem:[%s3 + $0x18] sm:$0xf]
    %v152 = vld [vmem:[%s3 + $0x1c] sm:$0xf]
    %v153 = vld [vmem:[%s3 + $0x20] sm:$0xf]
    %v154 = vld [vmem:[%s3 + $0x24] sm:$0xf]
    %v155 = vld [vmem:[%s3 + $0x28] sm:$0xf]
    %v156 = vld [vmem:[%s3 + $0x2c] sm:$0xf]
    %v157 = vld [vmem:[%s3 + $0x30] sm:$0xf]
    %v158 = vld [vmem:[%s3 + $0x34] sm:$0xf]
    %v159 = vld [vmem:[%s3 + $0x38] sm:$0xf]
    %v160 = vld [vmem:[%s3 + $0x3c] sm:$0xf]
    %v161 = vld [vmem:[%s4] sm:$0x1]
    %v163 = vperm.slane %v161, 0
    %v181 = vunpack.c.l.b16 %v145
    %v182 = vunpack.c.l.b16 %v146
    %v183 = vunpack.c.l.b16 %v147
    %v184 = vunpack.c.l.b16 %v148
    %v185 = vunpack.c.l.b16 %v149
    %v186 = vunpack.c.l.b16 %v150
    %v187 = vunpack.c.l.b16 %v151
    %v188 = vunpack.c.l.b16 %v152
    %v189 = vunpack.c.l.b16 %v153
    %v190 = vunpack.c.l.b16 %v154
    %v191 = vunpack.c.l.b16 %v155
    %v192 = vunpack.c.l.b16 %v156
    %v193 = vunpack.c.l.b16 %v157
    %v194 = vunpack.c.l.b16 %v158
    %v195 = vunpack.c.l.b16 %v159
    %v196 = vunpack.c.l.b16 %v160
    %v197 = vpack.c.b16 %v182, %v181
    %v198 = vpack.c.b16 %v184, %v183
    %v199 = vpack.c.b16 %v186, %v185
    %v200 = vpack.c.b16 %v188, %v187
    %v201 = vpack.c.b16 %v190, %v189
    %v202 = vpack.c.b16 %v192, %v191
    %v203 = vpack.c.b16 %v194, %v193
    %v204 = vpack.c.b16 %v196, %v195
    %213 = vmatpush.bf16.msra.mxu0 %v204
    %214 = vmatpush.bf16.msra.mxu0 %v203
    %215 = vmatpush.bf16.msra.mxu0 %v202
    %216 = vmatpush.bf16.msra.mxu0 %v201
    %217 = vmatpush.bf16.msra.mxu0 %v200
    %218 = vmatpush.bf16.msra.mxu0 %v199
    %219 = vmatpush.bf16.msra.mxu0 %v198
    %220 = vmatpush.bf16.msra.mxu0 %v197
    %221 = vmatmul.bf16.gmra.mxu0 %v143
    %v222 = vpop.f32.mrf.mxu0
    %v223 = vadd.f32 %v163, %v222
    %v224 = vpop.f32.mrf.mxu0
    %v225 = vadd.f32 %v163, %v224
    %226 = vmatmul.bf16.gmra.mxu0 %v144
    %v227 = vpop.f32.mrf.mxu0
    %v228 = vadd.f32 %v163, %v227
    %v229 = vpop.f32.mrf.mxu0
    %v230 = vadd.f32 %v163, %v229
    %231 = vdwg.mxu0
    %232 = vst [vmem:[%s5] sm:$0xff] %v223
    %233 = vst [vmem:[%s5 + $0x8] sm:$0xff] %v225
    %234 = vst [vmem:[%s5 + $0x10] sm:$0xff] %v228
    %235 = vst [vmem:[%s5 + $0x18] sm:$0xff] %v230
    // Predicated region
    $region26: #{_lambda_.1} parent=1 // pred_check
      _
    $region27: #{_lambda_.1} parent=1 // pred_check_branch
      %237 = sbr.rel (0) target = $region29
    $region28: #{_lambda_.1} parent=1 // pred_region
      _
    $region29: #{_lambda_.1} parent=1 // pred_fallthru
      _
    // Predicated region
    $region30: #{_lambda_.1} parent=1 // pred_check
      _
    $region31: #{_lambda_.1} parent=1 // pred_check_branch
      %239 = sbr.rel (0) target = $region33
    $region32: #{_lambda_.1} parent=1 // pred_region
      _
    $region33: #{_lambda_.1} parent=1 // pred_fallthru
      _
    %240 = vsyncpa [#allocation3], 1

</llo_original>
